<compile_context>
chip_gen: v6e
topology: v6e:2x2x1
jax: 0.10.0
libtpu: 0.0.40
codegen_flags: <defaults>
</compile_context>

<pallas_src>
import functools
import math

import jax
import jax.numpy as jnp
from jax.experimental import pallas as pl
from jax.experimental.pallas import tpu as pltpu


def make_positional_encoding(d_model: int, max_len: int = 5000) -> jnp.ndarray:
    """Build pe exactly like the PyTorch module (__init__). Shape [max_len, 1, d_model]."""
    position = jnp.arange(max_len, dtype=jnp.float32)[:, None]            # [max_len, 1]
    div_term = jnp.exp(
        jnp.arange(0, d_model, 2, dtype=jnp.float32) * (-math.log(10000.0) / d_model)
    )                                                                      # [d_model//2]
    pe = jnp.zeros((max_len, 1, d_model), dtype=jnp.float32)
    pe = pe.at[:, 0, 0::2].set(jnp.sin(position * div_term))
    pe = pe.at[:, 0, 1::2].set(jnp.cos(position * div_term))
    return pe


# ---------------- Pallas kernels ----------------

def _pe_add_kernel(x_ref, pe_ref, o_ref, *, batch: int):
    # x_ref / o_ref: [ts, B*D] (b-major flatten of [ts, B, D]); pe_ref: [ts, D].
    # Element (s, b*D + d) needs pe[s, d], i.e. pe tiled B times along the lane axis.
    pe_b = jnp.tile(pe_ref[...], (1, batch)) if batch > 1 else pe_ref[...]
    o_ref[...] = (x_ref[...] + pe_b).astype(o_ref.dtype)


def _pe_add_dropout_kernel(x_ref, pe_ref, bits_ref, o_ref, *,
                           batch: int, threshold: int, scale: float):
    # Inverted dropout: keep with prob 1-p (bits >= threshold), scale by 1/(1-p).
    # All math in f32, single cast on the final store (no bf16-rounded scale).
    pe_b = jnp.tile(pe_ref[...], (1, batch)) if batch > 1 else pe_ref[...]
    y = (x_ref[...] + pe_b).astype(jnp.float32)
    keep = bits_ref[...] >= jnp.uint32(threshold)
    o_ref[...] = jnp.where(keep, y * jnp.float32(scale), jnp.float32(0.0)).astype(o_ref.dtype)


# ---------------- Tiling helper ----------------

def _roundup(x: int, m: int) -> int:
    return ((x + m - 1) // m) * m


def _choose_seq_tile(S: int, B: int, D: int, itemsize: int, *, training: bool,
                     target_block_bytes: int = 4 << 20,
                     vmem_budget_bytes: int = 24 << 20) -> int:
    """Pick a sequence tile so the PADDED, double-buffered VMEM footprint
    (x in + out + pe + dropout bits + f32 temporaries) stays under the scoped
    budget, each x block carries ~target_block_bytes of HBM traffic, and the
    grid keeps >= 2 steps so the 'parallel' axis can shard across TensorCores."""
    sub = max(8, 32 // max(1, itemsize))          # sublane multiple for this dtype
    lanes_x = _roundup(B * D, 128)
    lanes_pe = _roundup(D, 128)
    # padded VMEM bytes per sequence row
    row = 2 * lanes_x * itemsize                  # x, double-buffered
    row += 2 * lanes_x * itemsize                 # out, double-buffered
    row += 2 * lanes_pe * itemsize                # pe, double-buffered
    row += 2 * lanes_x * 4                        # f32 intermediates cushion
    if training:
        row += 2 * lanes_x * 4                    # uint32 random-bit blocks
        row += 2 * lanes_x * 4                    # extra f32 temporaries (where/scale)
    ts_budget = vmem_budget_bytes // max(1, row)
    ts_target = target_block_bytes // max(1, B * D * itemsize)
    ts = min(S, max(sub, ts_budget), max(sub, ts_target))
    if S >= 2 * sub:                              # keep nt >= 2 (v7x megacore sharding)
        ts = min(ts, -(-S // 2))                  # <= ceil(S/2)
    ts = max(sub, (ts // sub) * sub)              # 8-aligned sublane axis when tiled
    return min(ts, S)


# ---------------- Wrapper ----------------

def positional_encoding_forward(
    x: jnp.ndarray,
    pe_full: jnp.ndarray,
    *,
    dropout_p: float = 0.1,
    training: bool = False,
    seed: int = 0,
    tile_seq: int | None = None,
) -> jnp.ndarray:
    """x: [S, B, D] (torch layout).  pe_full: [max_len, 1, D].  Returns [S, B, D]."""
    S, B, D = x.shape
    dtype = x.dtype
    itemsize = jnp.dtype(dtype).itemsize

    if training and dropout_p >= 1.0:
        # torch.nn.Dropout(p=1.0) zeroes everything.
        return jnp.zeros_like(x)
    use_dropout = training and dropout_p > 0.0

    # Glue: slice pe (pe[:x.size(0)]), drop the size-1 batch axis, keep HBM narrow.
    pe = pe_full[:S, 0, :].astype(dtype)                 # [S, D]
    # Lane-dense layout: [S, B, D] -> [S, B*D]; contiguous, so the reshape is free.
    BD = B * D
    xf = x.reshape(S, BD)

    if tile_seq is None:
        ts = _choose_seq_tile(S, B, D, itemsize, training=use_dropout)
    else:
        sub = max(8, 32 // max(1, itemsize))
        ts = min(int(tile_seq), S)
        if ts < S:
            ts = max(sub, (ts // sub) * sub)
        ts = min(ts, S)
    nt = pl.cdiv(S, ts)

    flops = S * BD
    bytes_accessed = (2 * S * BD + S * D) * itemsize
    if use_dropout:
        flops = 3 * S * BD
        bytes_accessed += S * BD * 4                     # uint32 mask bits
    cost = pl.CostEstimate(flops=flops, transcendentals=0, bytes_accessed=bytes_accessed)
    cparams = pltpu.CompilerParams(
        dimension_semantics=("parallel",),               # megacore-shard the seq axis
        vmem_limit_bytes=32 * 1024 * 1024,
    )
    out_shape = jax.ShapeDtypeStruct((S, BD), dtype)
    x_spec = pl.BlockSpec((ts, BD), lambda i: (i, 0))
    pe_spec = pl.BlockSpec((ts, D), lambda i: (i, 0))
    out_spec = pl.BlockSpec((ts, BD), lambda i: (i, 0))

    if not use_dropout:
        out_f = pl.pallas_call(
            functools.partial(_pe_add_kernel, batch=B),
            out_shape=out_shape,
            grid_spec=pltpu.PrefetchScalarGridSpec(
                num_scalar_prefetch=0,
                grid=(nt,),
                in_specs=[x_spec, pe_spec],
                out_specs=out_spec),
            compiler_params=cparams,
            cost_estimate=cost,
        )(xf, pe)
    else:
        # TODO(synk): on-chip pltpu.prng_random_bits would avoid streaming the
        # uint32 mask from HBM, but that primitive does not lower in this
        # environment; the bits are drawn with jax.random in the wrapper and
        # only the mask/select/scale math runs in-kernel.  (The RNG stream
        # cannot bit-match torch's dropout by construction.)
        threshold = min(int(round(dropout_p * 4294967296.0)), 4294967295)
        scale = 1.0 / (1.0 - dropout_p)
        bits = jax.random.bits(jax.random.PRNGKey(seed), (S, BD), dtype=jnp.uint32)
        bits_spec = pl.BlockSpec((ts, BD), lambda i: (i, 0))
        out_f = pl.pallas_call(
            functools.partial(_pe_add_dropout_kernel, batch=B,
                              threshold=threshold, scale=scale),
            out_shape=out_shape,
            grid_spec=pltpu.PrefetchScalarGridSpec(
                num_scalar_prefetch=0,
                grid=(nt,),
                in_specs=[x_spec, pe_spec, bits_spec],
                out_specs=out_spec),
            compiler_params=cparams,
            cost_estimate=cost,
        )(xf, pe, bits)

    # Back to the module's [S, B, D] layout (free reshape, no transpose).
    return out_f.reshape(S, B, D)


if __name__ == "__main__":
    # Small shapes consistent with the module: x [seq_len, batch, d_model]
    S, B, D = 64, 2, 32
    key = jax.random.PRNGKey(0)
    x = jax.random.normal(key, (S, B, D), dtype=jnp.float32)

    pe_full = make_positional_encoding(d_model=D, max_len=128)
    ref = x + pe_full[:S]                              # broadcast [S,1,D] over batch

    # Eval-mode forward with an explicit multi-tile grid (tile_seq=16 -> 4 steps).
    out_eval = positional_encoding_forward(
        x, pe_full, dropout_p=0.1, training=False, tile_seq=16)
    out_eval = jax.block_until_ready(out_eval)
    assert out_eval.shape == (S, B, D)
    assert jnp.allclose(out_eval, ref, atol=1e-6), "eval mismatch vs reference"

    # Eval-mode forward with the auto-chosen tile size (>= 2 grid steps).
    out_eval2 = jax.block_until_ready(
        positional_encoding_forward(x, pe_full, dropout_p=0.1, training=False))
    assert jnp.allclose(out_eval2, ref, atol=1e-6), "auto-tile eval mismatch"

    # Training-mode forward: every element is either dropped (0) or kept and
    # scaled by 1/(1-p).  (RNG stream differs from torch by construction.)
    p = 0.1
    out_tr = positional_encoding_forward(
        x, pe_full, dropout_p=p, training=True, seed=123, tile_seq=16)
    out_tr = jax.block_until_ready(out_tr)
    scaled = ref / (1.0 - p)
    ok = jnp.isclose(out_tr, 0.0, atol=1e-6) | jnp.isclose(out_tr, scaled, rtol=1e-5, atol=1e-6)
    assert out_tr.shape == (S, B, D)
    assert bool(jnp.all(ok)), "training output not in {0, (x+pe)/(1-p)}"

    print("KERNEL_OK")
</pallas_src>

<mosaic_0001>
module attributes {stable_mosaic.version = 11 : i64} {
  func.func @_pe_add_kernel(%arg0: i32, %arg1: memref<16x64xf32, #tpu.memory_space<vmem>>, %arg2: memref<16x32xf32, #tpu.memory_space<vmem>>, %arg3: memref<16x64xf32, #tpu.memory_space<vmem>>) attributes {dimension_semantics = [#tpu.dimension_semantics<parallel>], iteration_bounds = array<i64: 4>, scalar_prefetch = 0 : i64, scratch_operands = 0 : i64, tpu.core_type = #tpu.core_type<tc>, window_params = [{transform_indices = @transform_0, window_bounds = array<i64: 16, 64>}, {transform_indices = @transform_1, window_bounds = array<i64: 16, 32>}, {transform_indices = @transform_2, window_bounds = array<i64: 16, 64>}]} {
    %c0 = arith.constant 0 : index
    %c0_0 = arith.constant 0 : index
    %0 = vector.load %arg2[%c0, %c0_0] : memref<16x32xf32, #tpu.memory_space<vmem>>, vector<16x32xf32>
    %1 = tpu.concatenate %0, %0 in 1 : vector<16x32xf32>, vector<16x32xf32> -> vector<16x64xf32>
    %c0_1 = arith.constant 0 : index
    %c0_2 = arith.constant 0 : index
    %2 = vector.load %arg1[%c0_1, %c0_2] : memref<16x64xf32, #tpu.memory_space<vmem>>, vector<16x64xf32>
    %3 = arith.addf %2, %1 : vector<16x64xf32>
    %c0_3 = arith.constant 0 : index
    %c0_4 = arith.constant 0 : index
    %4 = vector.load %arg3[%c0_3, %c0_4] : memref<16x64xf32, #tpu.memory_space<vmem>>, vector<16x64xf32>
    tpu.vector_store %arg3[%c0_3, %c0_4], %3 {strides = array<i32>} : memref<16x64xf32, #tpu.memory_space<vmem>>, vector<16x64xf32>,
    return
  }
  func.func @transform_0(%arg0: i32) -> (i32, i32) {
    %c0_i32 = arith.constant 0 : i32
    %c0_i32_0 = arith.constant 0 : i32
    return %arg0, %c0_i32 : i32, i32
  }
  func.func @transform_1(%arg0: i32) -> (i32, i32) {
    %c0_i32 = arith.constant 0 : i32
    %c0_i32_0 = arith.constant 0 : i32
    return %arg0, %c0_i32 : i32, i32
  }
  func.func @transform_2(%arg0: i32) -> (i32, i32) {
    %c0_i32 = arith.constant 0 : i32
    %c0_i32_0 = arith.constant 0 : i32
    return %arg0, %c0_i32 : i32, i32
  }
}

</mosaic_0001>

<llo_original>
// kernel: tpu_custom_call.1
$region0: #{tpu_custom_call.1}
  #allocation0 [shape = 'u32[]', space=smem, size = 0x4, offset = 0x4, fixed_abs, tag = 'smem constant byte address 0x4 - core index']
  #allocation1 [shape = 'u32[144,128]{1,0:T(1,128)}', space=vmem, size = 0x12000, scoped, tag = 'internal scratch']
  %s0 = inlined_call_operand.vmem [shape: f32[64,64], index: 0, kind: input, shape index: {}]
  %s1 = inlined_call_operand.vmem [shape: f32[64,32], index: 1, kind: input, shape index: {}]
  %s2 = inlined_call_operand.hbm [shape: f32[64,64], index: 2, kind: output, shape index: {}]
  %s3 = sld [smem:[#allocation0]]
  $region41: #{tpu_custom_call.1} parent=0
    _
  %s5 = ssub.s32 1, %s3
  %s6 = scalar_select 0, %s5, %s3
  $region1: #{tpu_custom_call.1} parent=0
    #allocation2 [shape = 'u8[16384]{0}', space=vmem, size = 0x4000, scoped, tag = 'output window, operand 0']
    #allocation3 [shape = 's32[2]{0}', space=sflag, size = 0x8, scoped, tag = 'scoped memory for tpu_custom_call.1']
    %7 = vsyncpa [#allocation3], 0
    %s8 = scalar_lea.sflag [#allocation3], 1
    %9 = vsyncpa %s8, 0
    loop: start=0, step=1, limit=6
    $region2: #{tpu_custom_call.1} parent=1 // loop_pre_header
      _
    $region3: #{tpu_custom_call.1} parent=1 // loop_header
      %s11 = sphi 0, %s15
      %p12 = scmp.ge.s32.totalorder %s11, 6
      %s21 = sphi 0, %s23
      %s24 = sphi 0, %s21
      %s25 = sphi 0, %s24
      %s41 = sphi 0, %s25
      %s47 = sphi 0, %s49
      %s50 = sphi 0, %s47
      %s51 = sphi 0, %s50
      %s67 = sphi 0, %s51
      %s73 = sphi 0, %s75
      %s76 = sphi 0, %s73
      %s77 = sphi 0, %s76
      %s93 = sphi 0, %s77
    $region4: #{tpu_custom_call.1} parent=1 // loop_header_branch
      %14 = sbr.rel (%p12) target = $region8
    $region5: #{tpu_custom_call.1} parent=1 // loop_body
      %s16 = ssub.s32 %s11, 1
      %s17 = ssub.s32 %s11, 2
      %s18 = sadd.s32 %s11, 1
      %s19 = ssub.s32 %s11, %s18
      %p20 = scmp.eq.s32.totalorder %s19, 0
      %s22 = sadd.s32 %s21, 1
      %s23 = scalar_select %p20, %s21, %s22
      %p26 = pneg %p20
      %p27 = scmp.eq.s32.totalorder %s11, 3
      %p28 = por %p26, %p27
      %p29 = scmp.ne.s32.totalorder %s21, %s24
      %p30 = scmp.eq.s32.totalorder %s11, 0
      %p31 = por %p29, %p30
      %p32 = scmp.ne.s32.totalorder %s21, %s24
      %p33 = scmp.eq.s32.totalorder %s16, 3
      %p34 = por %p32, %p33
      %p35 = scmp.ne.s32.totalorder %s24, %s25
      %p36 = scmp.eq.s32.totalorder %s16, 0
      %p37 = por %p35, %p36
      %p38 = scmp.ne.s32.totalorder %s24, %s25
      %p39 = scmp.eq.s32.totalorder %s17, 3
      %p40 = por %p38, %p39
      %p42 = scmp.ne.s32.totalorder %s25, %s41
      %p43 = scmp.eq.s32.totalorder %s17, 0
      %p44 = por %p42, %p43
      %s45 = ssub.s32 %s11, %s18
      %p46 = scmp.eq.s32.totalorder %s45, 0
      %s48 = sadd.s32 %s47, 1
      %s49 = scalar_select %p46, %s47, %s48
      %p52 = pneg %p46
      %p53 = scmp.eq.s32.totalorder %s11, 3
      %p54 = por %p52, %p53
      %p55 = scmp.ne.s32.totalorder %s47, %s50
      %p56 = scmp.eq.s32.totalorder %s11, 0
      %p57 = por %p55, %p56
      %p58 = scmp.ne.s32.totalorder %s47, %s50
      %p59 = scmp.eq.s32.totalorder %s16, 3
      %p60 = por %p58, %p59
      %p61 = scmp.ne.s32.totalorder %s50, %s51
      %p62 = scmp.eq.s32.totalorder %s16, 0
      %p63 = por %p61, %p62
      %p64 = scmp.ne.s32.totalorder %s50, %s51
      %p65 = scmp.eq.s32.totalorder %s17, 3
      %p66 = por %p64, %p65
      %p68 = scmp.ne.s32.totalorder %s51, %s67
      %p69 = scmp.eq.s32.totalorder %s17, 0
      %p70 = por %p68, %p69
      %s71 = ssub.s32 %s11, %s18
      %p72 = scmp.eq.s32.totalorder %s71, 0
      %s74 = sadd.s32 %s73, 1
      %s75 = scalar_select %p72, %s73, %s74
      %p78 = pneg %p72
      %p79 = scmp.eq.s32.totalorder %s11, 3
      %p80 = por %p78, %p79
      %p81 = scmp.ne.s32.totalorder %s73, %s76
      %p82 = scmp.eq.s32.totalorder %s11, 0
      %p83 = por %p81, %p82
      %p84 = scmp.ne.s32.totalorder %s73, %s76
      %p85 = scmp.eq.s32.totalorder %s16, 3
      %p86 = por %p84, %p85
      %p87 = scmp.ne.s32.totalorder %s76, %s77
      %p88 = scmp.eq.s32.totalorder %s16, 0
      %p89 = por %p87, %p88
      %p90 = scmp.ne.s32.totalorder %s76, %s77
      %p91 = scmp.eq.s32.totalorder %s17, 3
      %p92 = por %p90, %p91
      %p94 = scmp.ne.s32.totalorder %s77, %s93
      %p95 = scmp.eq.s32.totalorder %s17, 0
      %p96 = por %p94, %p95
      %p97 = scmp.le.s32.totalorder 1, %s11
      %p98 = scmp.lt.s32.totalorder %s11, 5
      %p99 = pnand %p97, %p98
      %p100 = pneg %p99
      // Predicated region
      $region9: #{tpu_custom_call.1} parent=5 // pred_check
        _
      $region10: #{tpu_custom_call.1} parent=5 // pred_check_branch
        %102 = sbr.rel (%p99) target = $region12
      $region11: #{tpu_custom_call.1} parent=5 // pred_region
        %s103 = ssub.s32 %s11, 1
      $region12: #{tpu_custom_call.1} parent=5 // pred_fallthru
        _
      %p104 = scmp.lt.s32.totalorder %s11, 4
      // Predicated region
      $region13: #{tpu_custom_call.1} parent=5 // pred_check
        %p105 = pneg %p104
      $region14: #{tpu_custom_call.1} parent=5 // pred_check_branch
        %107 = sbr.rel (%p105) target = $region16
      $region15: #{tpu_custom_call.1} parent=5 // pred_region
        // Predicated region
        $region17: #{tpu_custom_call.1} parent=15 // pred_check
          %p108 = pneg %p31
        $region18: #{tpu_custom_call.1} parent=15 // pred_check_branch
          %110 = sbr.rel (%p108) target = $region20
        $region19: #{tpu_custom_call.1} parent=15 // pred_region
          %s111 = smul.u32 2, %s11
          %p112 = scmp.lt.s32.totalorder %s111, 7
          %s113 = scalar_select %p112, %s111, 7
          %s114 = smul.addr %s113, 8
          %s115 = scalar_lea.vmem %s0, %s114
          %s116 = smul.u32 2, %s11
        $region20: #{tpu_custom_call.1} parent=15 // pred_fallthru
          _
        // Predicated region
        $region21: #{tpu_custom_call.1} parent=15 // pred_check
          %p117 = pneg %p57
        $region22: #{tpu_custom_call.1} parent=15 // pred_check_branch
          %119 = sbr.rel (%p117) target = $region24
        $region23: #{tpu_custom_call.1} parent=15 // pred_region
          %s120 = smul.u32 2, %s11
          %p121 = scmp.lt.s32.totalorder %s120, 7
          %s122 = scalar_select %p121, %s120, 7
          %s123 = smul.addr %s122, 8
          %s124 = scalar_lea.vmem %s1, %s123
          %s125 = smul.u32 2, %s11
        $region24: #{tpu_custom_call.1} parent=15 // pred_fallthru
          _
      $region16: #{tpu_custom_call.1} parent=5 // pred_fallthru
        _
      %p126 = scmp.le.s32.totalorder 1, %s11
      %p127 = scmp.lt.s32.totalorder %s11, 5
      %p128 = pnand %p126, %p127
      %p129 = pneg %p128
      // Predicated region
      $region25: #{tpu_custom_call.1} parent=5 // pred_check
        _
      $region26: #{tpu_custom_call.1} parent=5 // pred_check_branch
        %131 = sbr.rel (%p128) target = $region28
      $region27: #{tpu_custom_call.1} parent=5 // pred_region
        %s132 = ssub.s32 %s11, 1
        %s133 = smul.u32 2, %s16
        %p134 = scmp.lt.s32.totalorder %s133, 7
        %s135 = scalar_select %p134, %s133, 7
        %s136 = smul.addr %s135, 8
        %s137 = scalar_lea.vmem %s0, %s136
        %p138 = pneg %p37
        %p139 = pneg %p34
        %s140 = smul.u32 2, %s16
        %p141 = scmp.lt.s32.totalorder %s140, 7
        %s142 = scalar_select %p141, %s140, 7
        %s143 = smul.addr %s142, 8
        %s144 = scalar_lea.vmem %s1, %s143
        %p145 = pneg %p63
        %p146 = pneg %p60
        %p147 = pneg %p89
        %p148 = pneg %p86
        %s149 = sand.u32 %s76, 1
        %s150 = scalar_lea.sflag [#allocation3], %s149
        %s151 = sand.u32 %s76, 1
        %s152 = smul.addr %s151, 16
        %s153 = scalar_lea.vmem [#allocation2], %s152
        %s154 = smul.u32 2, %s16
        %p155 = scmp.lt.s32.totalorder %s154, 7
        %s156 = scalar_select %p155, %s154, 7
        %s157 = smul.addr %s156, 8
        %s158 = scalar_lea.vmem %s0, %s157
        %s159 = smul.u32 2, %s16
        %s160 = smul.u32 2, %s16
        %p161 = scmp.lt.s32.totalorder %s160, 7
        %s162 = scalar_select %p161, %s160, 7
        %s163 = smul.addr %s162, 8
        %s164 = scalar_lea.vmem %s1, %s163
        %s165 = smul.u32 2, %s16
        %s166 = smul.u32 2, %s16
        %v167 = vld [vmem:[%s164] sm:$0xff]
        %v168 = vld [vmem:[%s164 + $0x8] sm:$0xff]
        %171 = vrot.lane.b32.xlu0 %v167, 32
        %v172 = vpop.permute.xlu0 %171
        %173 = vrot.lane.b32.xlu0 %v168, 32
        %v174 = vpop.permute.xlu0 %173
        %vm177 = vcmask 261120
        %v178 = vsel %vm177, %v167, %v172
        %v179 = vsel %vm177, %v168, %v174
        %v180 = vld [vmem:[%s158] sm:$0xff]
        %v181 = vld [vmem:[%s158 + $0x8] sm:$0xff]
        %v182 = vadd.f32 %v180, %v178
        %v183 = vadd.f32 %v181, %v179
        %vm184 = vcmask 523264
        %185 = vst.msk [vmem:[%s153] sm:$0xff] %vm184, %v182
        %186 = vst.msk [vmem:[%s153 + $0x8] sm:$0xff] %vm184, %v183
        %s187 = sand.u32 %s76, 1
        %s188 = scalar_lea.sflag [#allocation3], %s187
        %s189 = sand.u32 %s76, 1
        %s190 = smul.addr %s189, 16
        %s191 = scalar_lea.vmem [#allocation2], %s190
        // Predicated region
        $region29: #{tpu_custom_call.1} parent=27 // pred_check
          %p192 = pneg %p86
        $region30: #{tpu_custom_call.1} parent=27 // pred_check_branch
          %194 = sbr.rel (%p192) target = $region32
        $region31: #{tpu_custom_call.1} parent=27 // pred_region
          %s195 = smul.u32 2, %s16
          %s197 = ssub.s32 256, 256
          %198 = vsyncadd %s188, %s197
          %s199 = smul.addr %s195, 128
          %s200 = scalar_lea.hbm %s2, %s199
          %s201 = sshll.u32 %s191, 4
          %s202 = int_to_ptr.vmem [resolvable:$true] %s201
          %207 = dma.vmem_to_hbm [thread:$0]  %s202, 256, %s200, %s188, 128, 128, 8
        $region32: #{tpu_custom_call.1} parent=27 // pred_fallthru
          _
      $region28: #{tpu_custom_call.1} parent=5 // pred_fallthru
        _
      %p208 = scmp.le.s32.totalorder 2, %s11
      // Predicated region
      $region33: #{tpu_custom_call.1} parent=5 // pred_check
        %p209 = pneg %p208
      $region34: #{tpu_custom_call.1} parent=5 // pred_check_branch
        %211 = sbr.rel (%p209) target = $region36
      $region35: #{tpu_custom_call.1} parent=5 // pred_region
        %s212 = ssub.s32 %s11, 2
        // Predicated region
        $region37: #{tpu_custom_call.1} parent=35 // pred_check
          %p213 = pneg %p92
        $region38: #{tpu_custom_call.1} parent=35 // pred_check_branch
          %215 = sbr.rel (%p213) target = $region40
        $region39: #{tpu_custom_call.1} parent=35 // pred_region
          %s216 = sand.u32 %s77, 1
          %s217 = scalar_lea.sflag [#allocation3], %s216
          %s218 = sand.u32 %s77, 1
          %s219 = smul.addr %s218, 16
          %s220 = scalar_lea.vmem [#allocation2], %s219
          %221 = dma.done %s217, 256
        $region40: #{tpu_custom_call.1} parent=35 // pred_fallthru
          _
      $region36: #{tpu_custom_call.1} parent=5 // pred_fallthru
        _
    $region6: #{tpu_custom_call.1} parent=1 // loop_footer
      %s15 = sadd.s32 1, %s11
    $region7: #{tpu_custom_call.1} parent=1 // loop_footer_branch
      %10 = sbr.rel target = $region3
    $region8: #{tpu_custom_call.1} parent=1 // loop_exit
      _
    %222 = vsyncpa [#allocation3], 1
    %s223 = scalar_lea.sflag [#allocation3], 1
    %224 = vsyncpa %s223, 1

</llo_original>
